<compile_context>
chip_gen: v7x
topology: tpu7x:2x2x1
jax: 0.10.0
libtpu: 0.0.40
codegen_flags: <defaults>
</compile_context>

<pallas_src>
import math

import jax
import jax.numpy as jnp
from jax.experimental import pallas as pl
from jax.experimental.pallas import tpu as pltpu

MAX_VAL = 1e9  # masked_fill constant (scores.masked_fill(mask == 0, -MAX_VAL))


# --------------------------------------------------------------------------
# Pallas kernel: one batch element, all heads, full (L, L) attention
# --------------------------------------------------------------------------
def _locker_attn_kernel(mask_ref, gate_ref, q_ref, k_ref, v_ref, out_ref, *p_refs):
    q = q_ref[0]                       # (H, L, Dk)  bf16
    k = k_ref[0]                       # (H, L, Dk)  bf16
    v = v_ref[0]                       # (H, L, Dk)  bf16
    gate = gate_ref[...]               # (H, L, L)   f32, includes 1/sqrt(d_k)
    m = mask_ref[0]                    # (L, L)      int8, 0 == masked

    # QK^T (contract last axes, no explicit transpose), f32 accumulation
    s = jnp.einsum('hqd,hkd->hqk', q, k, preferred_element_type=jnp.float32)
    s = s * gate                                        # scale + sigmoid rel gate
    s = jnp.where((m != 0)[None, :, :], s, -MAX_VAL)    # mask broadcast over heads

    mx = jnp.max(s, axis=-1, keepdims=True)
    e = jnp.exp(s - mx)
    p = e * pl.reciprocal(jnp.sum(e, axis=-1, keepdims=True), approx=True)

    if p_refs:                                          # optional attention probs
        p_refs[0][0] = p

    out_ref[0] = jnp.einsum('hqk,hkd->hqd', p.astype(v.dtype), v,
                            preferred_element_type=jnp.float32).astype(out_ref.dtype)


def _locker_attention(q, k, v, mask, gate, *, return_p=True):
    """q, k, v: (B, H, L, Dk) bf16; mask: (B, L, L) int8; gate: (H, L, L) f32."""
    B, H, L, DK = q.shape

    spec_qkv = pl.BlockSpec((1, H, L, DK), lambda b: (b, 0, 0, 0))
    spec_mask = pl.BlockSpec((1, L, L), lambda b: (b, 0, 0))
    spec_gate = pl.BlockSpec((H, L, L), lambda b: (0, 0, 0))   # constant -> fetched once

    out_shapes = [jax.ShapeDtypeStruct((B, H, L, DK), jnp.float32)]
    out_specs = [pl.BlockSpec((1, H, L, DK), lambda b: (b, 0, 0, 0))]
    if return_p:
        out_shapes.append(jax.ShapeDtypeStruct((B, H, L, L), jnp.float32))
        out_specs.append(pl.BlockSpec((1, H, L, L), lambda b: (b, 0, 0, 0)))

    results = pl.pallas_call(
        _locker_attn_kernel,
        out_shape=tuple(out_shapes),
        grid_spec=pltpu.PrefetchScalarGridSpec(
            num_scalar_prefetch=0,
            grid=(B,),
            in_specs=[spec_mask, spec_gate, spec_qkv, spec_qkv, spec_qkv],
            out_specs=tuple(out_specs)),
        compiler_params=pltpu.CompilerParams(
            dimension_semantics=("parallel",),
            vmem_limit_bytes=32 * 1024 * 1024),
    )(mask, gate, q, k, v)

    if return_p:
        out, p = results
        return out, p
    return results[0], None


# --------------------------------------------------------------------------
# Module (parameter setup + glue in plain JAX)
# --------------------------------------------------------------------------
class AttentionInitial:
    """LOCKER Attention with local_type='initial', is_relative=True."""

    def __init__(self, n, d, d_k, global_num, local_num, key):
        assert d // d_k == global_num + local_num and global_num > 0
        self.n, self.d, self.d_k = n, d, d_k
        self.global_num, self.local_num = global_num, local_num

        k1, k2 = jax.random.split(key)
        # nn.Embedding(n, d_k * local_num) weights
        self.abs_pos_emb_query = jax.random.normal(k1, (n, d_k * local_num), jnp.float32)
        self.abs_pos_emb_key = jax.random.normal(k2, (n, d_k * local_num), jnp.float32)

        # rel_pos_score.weight initialised to a Gaussian bump (as in __init__)
        sigma, alpha = 0.5, 1.0
        x = jnp.arange(2 * n - 1, dtype=jnp.float32) - n
        init_val = alpha * jnp.exp(-((x / sigma) ** 2) / 2.0)
        self.rel_pos_score = jnp.tile(init_val[:, None], (1, local_num))   # (2n-1, local_num)

        pos_l = jnp.arange(n)[:, None]
        pos_r = jnp.arange(n)[None, :]
        self.distance = pos_r - pos_l + n - 1                              # (n, n)

    def _gate(self, l):
        """(H, l, l) multiplicative gate with 1/sqrt(d_k) folded in."""
        scale = 1.0 / math.sqrt(self.d_k)
        rw = self.rel_pos_score[self.distance[:l, :l]]          # (l, l, local_num)
        gate_l = jax.nn.sigmoid(rw / 0.1)                       # sigmoid(reweight / 0.1)
        gate_l = jnp.transpose(gate_l, (2, 0, 1))               # (local_num, l, l)
        gate_g = jnp.ones((self.global_num, l, l), jnp.float32)
        return jnp.concatenate([gate_g, gate_l], axis=0) * scale

    def __call__(self, query, key, value, mask, return_p=True):
        b, h, l, d_k = query.shape
        g, ln = self.global_num, self.local_num

        # absolute position embeddings for the local heads (index = distance[-1])
        index = self.distance[-1]                                # == arange(n)
        q_pos = self.abs_pos_emb_query[index].reshape(1, ln, l, d_k)
        k_pos = self.abs_pos_emb_key[index].reshape(1, ln, l, d_k)
        q_full = jnp.concatenate([query[:, :g], query[:, g:] + q_pos], axis=1)
        k_full = jnp.concatenate([key[:, :g], key[:, g:] + k_pos], axis=1)

        # per-batch mask (no head broadcast), int8 for 4x less DMA than int32
        mask_b = jnp.broadcast_to(mask, (b, 1, l, l)).reshape(b, l, l).astype(jnp.int8)
        gate = self._gate(l)                                     # (H, l, l) f32

        # bf16 operands for the MXU matmuls (f32 accumulation inside the kernel)
        out, p = _locker_attention(q_full.astype(jnp.bfloat16),
                                   k_full.astype(jnp.bfloat16),
                                   value.astype(jnp.bfloat16),
                                   mask_b, gate, return_p=return_p)
        if return_p:
            return out, (p[:, :g], p[:, g:])
        return out, (None, None)

    # pure-JAX f32 reference for a correctness check
    def reference(self, query, key, value, mask):
        b, h, l, d_k = query.shape
        g, ln = self.global_num, self.local_num
        q_g, k_g, v_g = query[:, :g], key[:, :g], value[:, :g]
        q_l, k_l, v_l = query[:, g:], key[:, g:], value[:, g:]
        index = self.distance[-1]
        q_l = q_l + self.abs_pos_emb_query[index].reshape(1, ln, l, d_k)
        k_l = k_l + self.abs_pos_emb_key[index].reshape(1, ln, l, d_k)

        s_g = jnp.einsum('bhqd,bhkd->bhqk', q_g, k_g) / math.sqrt(d_k)
        s_g = jnp.where(mask != 0, s_g, -MAX_VAL)
        p_g = jax.nn.softmax(s_g, axis=-1)
        o_g = jnp.einsum('bhqk,bhkd->bhqd', p_g, v_g)

        s_l = jnp.einsum('bhqd,bhkd->bhqk', q_l, k_l) / math.sqrt(d_k)
        rw = jnp.transpose(self.rel_pos_score[self.distance][None], (0, 3, 1, 2))
        s_l = s_l * jax.nn.sigmoid(rw / 0.1)
        s_l = jnp.where(mask != 0, s_l, -MAX_VAL)
        p_l = jax.nn.softmax(s_l, axis=-1)
        o_l = jnp.einsum('bhqk,bhkd->bhqd', p_l, v_l)
        return jnp.concatenate([o_g, o_l], axis=1), (p_g, p_l)


# TODO(synk): other local_type branches ('none', 'conv', 'rnn', 'win', 'adapt')
# are not implemented here; this script reproduces the 'initial' configuration.

if __name__ == "__main__":
    b, n, d, d_k = 2, 8, 32, 16          # h = d // d_k = 2
    global_num, local_num = 1, 1
    l = n

    key = jax.random.PRNGKey(0)
    kq, kk, kv, kp = jax.random.split(key, 4)
    query = jax.random.normal(kq, (b, d // d_k, l, d_k), jnp.float32)
    keyt = jax.random.normal(kk, (b, d // d_k, l, d_k), jnp.float32)
    value = jax.random.normal(kv, (b, d // d_k, l, d_k), jnp.float32)

    # padding-style mask: (b, 1, l, l); batch 0 fully valid, batch 1 has 3 padded keys
    lengths = jnp.array([l, l - 3])
    valid = (jnp.arange(l)[None, :] < lengths[:, None]).astype(jnp.int32)   # (b, l)
    mask = jnp.broadcast_to(valid[:, None, None, :], (b, 1, l, l))

    attn = AttentionInitial(n, d, d_k, global_num, local_num, kp)

    out, (p_g, p_l) = attn(query, keyt, value, mask)
    out = jax.block_until_ready(out)
    p_g = jax.block_until_ready(p_g)
    p_l = jax.block_until_ready(p_l)

    ref_out, (ref_pg, ref_pl) = attn.reference(query, keyt, value, mask)
    assert out.shape == (b, d // d_k, l, d_k)
    # bf16 matmul operands + approx reciprocal -> compare against f32 reference
    # with a correspondingly loose tolerance.
    assert jnp.allclose(out, ref_out, atol=5e-2, rtol=5e-2)
    assert jnp.allclose(p_g, ref_pg, atol=5e-2, rtol=5e-2)
    assert jnp.allclose(p_l, ref_pl, atol=5e-2, rtol=5e-2)

    print("KERNEL_OK")
</pallas_src>

<mosaic_0001>
module attributes {stable_mosaic.version = 11 : i64} {
  func.func @_locker_attn_kernel(%arg0: i32, %arg1: memref<1x8x8xi8, #tpu.memory_space<vmem>>, %arg2: memref<2x8x8xf32, #tpu.memory_space<vmem>>, %arg3: memref<1x2x8x16xbf16, #tpu.memory_space<vmem>>, %arg4: memref<1x2x8x16xbf16, #tpu.memory_space<vmem>>, %arg5: memref<1x2x8x16xbf16, #tpu.memory_space<vmem>>, %arg6: memref<1x2x8x16xf32, #tpu.memory_space<vmem>>, %arg7: memref<1x2x8x8xf32, #tpu.memory_space<vmem>>) attributes {dimension_semantics = [#tpu.dimension_semantics<parallel>], iteration_bounds = array<i64: 2>, scalar_prefetch = 0 : i64, scratch_operands = 0 : i64, tpu.core_type = #tpu.core_type<tc>, window_params = [{transform_indices = @transform_0, window_bounds = array<i64: 1, 8, 8>}, {pipeline_mode = #tpu.pipeline_mode<synchronous>, transform_indices = @transform_1, window_bounds = array<i64: 2, 8, 8>}, {transform_indices = @transform_2, window_bounds = array<i64: 1, 2, 8, 16>}, {transform_indices = @transform_3, window_bounds = array<i64: 1, 2, 8, 16>}, {transform_indices = @transform_4, window_bounds = array<i64: 1, 2, 8, 16>}, {transform_indices = @transform_5, window_bounds = array<i64: 1, 2, 8, 16>}, {transform_indices = @transform_6, window_bounds = array<i64: 1, 2, 8, 8>}]} {
    %c0 = arith.constant 0 : index
    %c0_0 = arith.constant 0 : index
    %c0_1 = arith.constant 0 : index
    %c0_2 = arith.constant 0 : index
    %0 = vector.load %arg3[%c0, %c0_0, %c0_1, %c0_2] : memref<1x2x8x16xbf16, #tpu.memory_space<vmem>>, vector<1x2x8x16xbf16>
    %1 = vector.shape_cast %0 : vector<1x2x8x16xbf16> to vector<2x8x16xbf16>
    %c0_3 = arith.constant 0 : index
    %c0_4 = arith.constant 0 : index
    %c0_5 = arith.constant 0 : index
    %c0_6 = arith.constant 0 : index
    %2 = vector.load %arg4[%c0_3, %c0_4, %c0_5, %c0_6] : memref<1x2x8x16xbf16, #tpu.memory_space<vmem>>, vector<1x2x8x16xbf16>
    %3 = vector.shape_cast %2 : vector<1x2x8x16xbf16> to vector<2x8x16xbf16>
    %c0_7 = arith.constant 0 : index
    %c0_8 = arith.constant 0 : index
    %c0_9 = arith.constant 0 : index
    %c0_10 = arith.constant 0 : index
    %4 = vector.load %arg5[%c0_7, %c0_8, %c0_9, %c0_10] : memref<1x2x8x16xbf16, #tpu.memory_space<vmem>>, vector<1x2x8x16xbf16>
    %5 = vector.shape_cast %4 : vector<1x2x8x16xbf16> to vector<2x8x16xbf16>
    %c0_11 = arith.constant 0 : index
    %c0_12 = arith.constant 0 : index
    %c0_13 = arith.constant 0 : index
    %6 = vector.load %arg2[%c0_11, %c0_12, %c0_13] : memref<2x8x8xf32, #tpu.memory_space<vmem>>, vector<2x8x8xf32>
    %c0_14 = arith.constant 0 : index
    %c0_15 = arith.constant 0 : index
    %c0_16 = arith.constant 0 : index
    %7 = vector.load %arg1[%c0_14, %c0_15, %c0_16] : memref<1x8x8xi8, #tpu.memory_space<vmem>>, vector<1x8x8xi8>
    %8 = vector.shape_cast %7 : vector<1x8x8xi8> to vector<8x8xi8>
    "tpu.trace_start"() <{level = 10 : i32, message = "hqd,hkd->hqk"}> : () -> ()
    %cst = arith.constant dense<0.000000e+00> : vector<2x8x8xf32>
    %9 = tpu.matmul %1, %3, %cst {dimension_numbers = #tpu.dot_dimension_numbers<[2], [2], [1], [1], [0, 0, 0, 1, 1, 1], [0], [0]>} : vector<2x8x16xbf16>, vector<2x8x16xbf16>, vector<2x8x8xf32> -> vector<2x8x8xf32>
    "tpu.trace_stop"() : () -> ()
    %10 = arith.mulf %9, %6 : vector<2x8x8xf32>
    %c0_i8 = arith.constant 0 : i8
    %11 = vector.broadcast %c0_i8 : i8 to vector<8x8xi8>
    %12 = arith.cmpi ne, %8, %11 : vector<8x8xi8>
    %13 = vector.shape_cast %12 : vector<8x8xi1> to vector<1x8x8xi1>
    %cst_17 = arith.constant -1.000000e+09 : f32
    %14 = vector.shape_cast %13 : vector<1x8x8xi1> to vector<1x8x8xi1>
    %15 = vector.broadcast %14 : vector<1x8x8xi1> to vector<2x8x8xi1>
    %16 = vector.broadcast %cst_17 : f32 to vector<2x8x8xf32>
    %17 = arith.select %15, %10, %16 : vector<2x8x8xi1>, vector<2x8x8xf32>
    %cst_18 = arith.constant dense<0xFF800000> : vector<2x8xf32>
    %18 = vector.multi_reduction <maximumf>, %17, %cst_18 [2] : vector<2x8x8xf32> to vector<2x8xf32>
    %19 = vector.shape_cast %18 : vector<2x8xf32> to vector<2x8x1xf32>
    %20 = vector.broadcast %19 : vector<2x8x1xf32> to vector<2x8x8xf32>
    %21 = arith.subf %17, %20 : vector<2x8x8xf32>
    %22 = math.exp %21 : vector<2x8x8xf32>
    %cst_19 = arith.constant dense<0.000000e+00> : vector<2x8xf32>
    %23 = vector.multi_reduction <add>, %22, %cst_19 [2] : vector<2x8x8xf32> to vector<2x8xf32>
    %24 = vector.shape_cast %23 : vector<2x8xf32> to vector<2x8x1xf32>
    %25 = tpu.reciprocal %24 {approx = true} : vector<2x8x1xf32> -> vector<2x8x1xf32>
    %26 = vector.broadcast %25 : vector<2x8x1xf32> to vector<2x8x8xf32>
    %27 = arith.mulf %22, %26 : vector<2x8x8xf32>
    %c0_20 = arith.constant 0 : index
    %c0_21 = arith.constant 0 : index
    %c0_22 = arith.constant 0 : index
    %c0_23 = arith.constant 0 : index
    %28 = vector.load %arg7[%c0_20, %c0_21, %c0_22, %c0_23] : memref<1x2x8x8xf32, #tpu.memory_space<vmem>>, vector<1x2x8x8xf32>
    %29 = vector.shape_cast %28 : vector<1x2x8x8xf32> to vector<2x8x8xf32>
    %30 = vector.shape_cast %27 : vector<2x8x8xf32> to vector<1x2x8x8xf32>
    tpu.vector_store %arg7[%c0_20, %c0_21, %c0_22, %c0_23], %30 {strides = array<i32>} : memref<1x2x8x8xf32, #tpu.memory_space<vmem>>, vector<1x2x8x8xf32>,
    %31 = arith.truncf %27 : vector<2x8x8xf32> to vector<2x8x8xbf16>
    "tpu.trace_start"() <{level = 10 : i32, message = "hqk,hkd->hqd"}> : () -> ()
    %cst_24 = arith.constant dense<0.000000e+00> : vector<2x8x16xf32>
    %32 = tpu.matmul %31, %5, %cst_24 {dimension_numbers = #tpu.dot_dimension_numbers<[2], [1], [1], [2], [0, 0, 0, 1, 1, 2], [0], [0]>} : vector<2x8x8xbf16>, vector<2x8x16xbf16>, vector<2x8x16xf32> -> vector<2x8x16xf32>
    "tpu.trace_stop"() : () -> ()
    %c0_25 = arith.constant 0 : index
    %c0_26 = arith.constant 0 : index
    %c0_27 = arith.constant 0 : index
    %c0_28 = arith.constant 0 : index
    %33 = vector.load %arg6[%c0_25, %c0_26, %c0_27, %c0_28] : memref<1x2x8x16xf32, #tpu.memory_space<vmem>>, vector<1x2x8x16xf32>
    %34 = vector.shape_cast %33 : vector<1x2x8x16xf32> to vector<2x8x16xf32>
    %35 = vector.shape_cast %32 : vector<2x8x16xf32> to vector<1x2x8x16xf32>
    tpu.vector_store %arg6[%c0_25, %c0_26, %c0_27, %c0_28], %35 {strides = array<i32>} : memref<1x2x8x16xf32, #tpu.memory_space<vmem>>, vector<1x2x8x16xf32>,
    return
  }
  func.func @transform_0(%arg0: i32) -> (i32, i32, i32) {
    %c0_i32 = arith.constant 0 : i32
    %c0_i32_0 = arith.constant 0 : i32
    %c0_i32_1 = arith.constant 0 : i32
    return %arg0, %c0_i32, %c0_i32_0 : i32, i32, i32
  }
  func.func @transform_1(%arg0: i32) -> (i32, i32, i32) {
    %c0_i32 = arith.constant 0 : i32
    %c0_i32_0 = arith.constant 0 : i32
    %c0_i32_1 = arith.constant 0 : i32
    %c0_i32_2 = arith.constant 0 : i32
    return %c0_i32, %c0_i32_0, %c0_i32_1 : i32, i32, i32
  }
  func.func @transform_2(%arg0: i32) -> (i32, i32, i32, i32) {
    %c0_i32 = arith.constant 0 : i32
    %c0_i32_0 = arith.constant 0 : i32
    %c0_i32_1 = arith.constant 0 : i32
    %c0_i32_2 = arith.constant 0 : i32
    return %arg0, %c0_i32, %c0_i32_0, %c0_i32_1 : i32, i32, i32, i32
  }
  func.func @transform_3(%arg0: i32) -> (i32, i32, i32, i32) {
    %c0_i32 = arith.constant 0 : i32
    %c0_i32_0 = arith.constant 0 : i32
    %c0_i32_1 = arith.constant 0 : i32
    %c0_i32_2 = arith.constant 0 : i32
    return %arg0, %c0_i32, %c0_i32_0, %c0_i32_1 : i32, i32, i32, i32
  }
  func.func @transform_4(%arg0: i32) -> (i32, i32, i32, i32) {
    %c0_i32 = arith.constant 0 : i32
    %c0_i32_0 = arith.constant 0 : i32
    %c0_i32_1 = arith.constant 0 : i32
    %c0_i32_2 = arith.constant 0 : i32
    return %arg0, %c0_i32, %c0_i32_0, %c0_i32_1 : i32, i32, i32, i32
  }
  func.func @transform_5(%arg0: i32) -> (i32, i32, i32, i32) {
    %c0_i32 = arith.constant 0 : i32
    %c0_i32_0 = arith.constant 0 : i32
    %c0_i32_1 = arith.constant 0 : i32
    %c0_i32_2 = arith.constant 0 : i32
    return %arg0, %c0_i32, %c0_i32_0, %c0_i32_1 : i32, i32, i32, i32
  }
  func.func @transform_6(%arg0: i32) -> (i32, i32, i32, i32) {
    %c0_i32 = arith.constant 0 : i32
    %c0_i32_0 = arith.constant 0 : i32
    %c0_i32_1 = arith.constant 0 : i32
    %c0_i32_2 = arith.constant 0 : i32
    return %arg0, %c0_i32, %c0_i32_0, %c0_i32_1 : i32, i32, i32, i32
  }
}

</mosaic_0001>

<llo_original>
// kernel: tpu_custom_call.1
$region0: #{tpu_custom_call.1}
  #allocation0 [shape = 'u32[]', space=smem, size = 0x4, offset = 0x4, fixed_abs, tag = 'smem constant byte address 0x4 - core index']
  #allocation1 [shape = 'u32[144,128]{1,0:T(1,128)}', space=vmem, size = 0x12000, scoped, tag = 'internal scratch']
  %s0 = inlined_call_operand.hbm [shape: s8[2,8,8], index: 0, kind: input, shape index: {}]
  %s1 = inlined_call_operand.hbm [shape: f32[2,8,8], index: 1, kind: input, shape index: {}]
  %s2 = inlined_call_operand.hbm [shape: bf16[2,2,8,16], index: 2, kind: input, shape index: {}]
  %s3 = inlined_call_operand.hbm [shape: bf16[2,2,8,16], index: 3, kind: input, shape index: {}]
  %s4 = inlined_call_operand.hbm [shape: bf16[2,2,8,16], index: 4, kind: input, shape index: {}]
  %s5 = inlined_call_operand.hbm [shape: f32[2,2,8,16], index: 5, kind: output, shape index: {0}]
  %s6 = inlined_call_operand.hbm [shape: f32[2,2,8,8], index: 6, kind: output, shape index: {1}]
  %7 = xla_tuple %s5, %s6
  %s8 = sld [smem:[#allocation0]]
  $region81: #{tpu_custom_call.1} parent=0
    _
  %s10 = ssub.s32 1, %s8
  %s11 = scalar_select 0, %s10, %s8
  $region1: #{tpu_custom_call.1} parent=0
    #allocation2 [shape = 'u8[2048]{0}', space=vmem, size = 0x800, scoped, tag = 'input window, operand 0']
    #allocation3 [shape = 's32[2]{0}', space=sflag, size = 0x8, scoped, tag = 'scoped memory for tpu_custom_call.1']
    #allocation4 [shape = 's32[2]{0}', space=sflag, size = 0x8, scoped, tag = 'scoped memory for tpu_custom_call.1']
    #allocation5 [shape = 'u8[8192]{0}', space=vmem, size = 0x2000, scoped, tag = 'input window, operand 1, single buffered']
    #allocation6 [shape = 's32[1]{0}', space=sflag, size = 0x4, scoped, tag = 'scoped memory for tpu_custom_call.1']
    #allocation7 [shape = 'u8[8192]{0}', space=vmem, size = 0x2000, scoped, tag = 'input window, operand 2']
    #allocation8 [shape = 'u8[8192]{0}', space=vmem, size = 0x2000, scoped, tag = 'input window, operand 3']
    #allocation9 [shape = 'u8[8192]{0}', space=vmem, size = 0x2000, scoped, tag = 'input window, operand 4']
    #allocation10 [shape = 'u8[16384]{0}', space=vmem, size = 0x4000, scoped, tag = 'output window, operand 0']
    #allocation11 [shape = 'u8[16384]{0}', space=vmem, size = 0x4000, scoped, tag = 'output window, operand 1']
    #allocation12 [shape = 's32[2]{0}', space=sflag, size = 0x8, scoped, tag = 'scoped memory for tpu_custom_call.1']
    %12 = vsyncpa [#allocation3], 0
    %s13 = scalar_lea.sflag [#allocation3], 1
    %14 = vsyncpa %s13, 0
    %15 = vsyncpa [#allocation6], 0
    %16 = vsyncpa [#allocation4], 0
    %s17 = scalar_lea.sflag [#allocation4], 1
    %18 = vsyncpa %s17, 0
    %19 = vsyncpa [#allocation12], 0
    %s20 = scalar_lea.sflag [#allocation12], 1
    %21 = vsyncpa %s20, 0
    loop: start=0, step=1, limit=4
    $region2: #{tpu_custom_call.1} parent=1 // loop_pre_header
      _
    $region3: #{tpu_custom_call.1} parent=1 // loop_header
      %s23 = sphi 0, %s27
      %p24 = scmp.ge.s32.totalorder %s23, 4
      %s33 = sphi 0, %s35
      %s36 = sphi 0, %s33
      %s37 = sphi 0, %s36
      %s53 = sphi 0, %s37
      %s57 = sphi 0, %s57
      %s59 = sphi 0, %s57
      %s60 = sphi 0, %s59
      %s74 = sphi 0, %s60
      %s80 = sphi 0, %s82
      %s83 = sphi 0, %s80
      %s84 = sphi 0, %s83
      %s100 = sphi 0, %s84
      %s106 = sphi 0, %s108
      %s109 = sphi 0, %s106
      %s110 = sphi 0, %s109
      %s126 = sphi 0, %s110
      %s132 = sphi 0, %s134
      %s135 = sphi 0, %s132
      %s136 = sphi 0, %s135
      %s152 = sphi 0, %s136
      %s158 = sphi 0, %s160
      %s161 = sphi 0, %s158
      %s162 = sphi 0, %s161
      %s178 = sphi 0, %s162
      %s184 = sphi 0, %s186
      %s187 = sphi 0, %s184
      %s188 = sphi 0, %s187
      %s204 = sphi 0, %s188
    $region4: #{tpu_custom_call.1} parent=1 // loop_header_branch
      %26 = sbr.rel (%p24) target = $region8
    $region5: #{tpu_custom_call.1} parent=1 // loop_body
      %s28 = ssub.s32 %s23, 1
      %s29 = ssub.s32 %s23, 2
      %s30 = sadd.s32 %s23, 1
      %s31 = ssub.s32 %s23, %s30
      %p32 = scmp.eq.s32.totalorder %s31, 0
      %s34 = sadd.s32 %s33, 1
      %s35 = scalar_select %p32, %s33, %s34
      %p38 = pneg %p32
      %p39 = scmp.eq.s32.totalorder %s23, 1
      %p40 = por %p38, %p39
      %p41 = scmp.ne.s32.totalorder %s33, %s36
      %p42 = scmp.eq.s32.totalorder %s23, 0
      %p43 = por %p41, %p42
      %p44 = scmp.ne.s32.totalorder %s33, %s36
      %p45 = scmp.eq.s32.totalorder %s28, 1
      %p46 = por %p44, %p45
      %p47 = scmp.ne.s32.totalorder %s36, %s37
      %p48 = scmp.eq.s32.totalorder %s28, 0
      %p49 = por %p47, %p48
      %p50 = scmp.ne.s32.totalorder %s36, %s37
      %p51 = scmp.eq.s32.totalorder %s29, 1
      %p52 = por %p50, %p51
      %p54 = scmp.ne.s32.totalorder %s37, %s53
      %p55 = scmp.eq.s32.totalorder %s29, 0
      %p56 = por %p54, %p55
      %s58 = sadd.s32 %s57, 1
      %p61 = scmp.eq.s32.totalorder %s23, 1
      %p62 = scmp.ne.s32.totalorder %s57, %s59
      %p63 = scmp.eq.s32.totalorder %s23, 0
      %p64 = por %p62, %p63
      %p65 = scmp.ne.s32.totalorder %s57, %s59
      %p66 = scmp.eq.s32.totalorder %s28, 1
      %p67 = por %p65, %p66
      %p68 = scmp.ne.s32.totalorder %s59, %s60
      %p69 = scmp.eq.s32.totalorder %s28, 0
      %p70 = por %p68, %p69
      %p71 = scmp.ne.s32.totalorder %s59, %s60
      %p72 = scmp.eq.s32.totalorder %s29, 1
      %p73 = por %p71, %p72
      %p75 = scmp.ne.s32.totalorder %s60, %s74
      %p76 = scmp.eq.s32.totalorder %s29, 0
      %p77 = por %p75, %p76
      %s78 = ssub.s32 %s23, %s30
      %p79 = scmp.eq.s32.totalorder %s78, 0
      %s81 = sadd.s32 %s80, 1
      %s82 = scalar_select %p79, %s80, %s81
      %p85 = pneg %p79
      %p86 = scmp.eq.s32.totalorder %s23, 1
      %p87 = por %p85, %p86
      %p88 = scmp.ne.s32.totalorder %s80, %s83
      %p89 = scmp.eq.s32.totalorder %s23, 0
      %p90 = por %p88, %p89
      %p91 = scmp.ne.s32.totalorder %s80, %s83
      %p92 = scmp.eq.s32.totalorder %s28, 1
      %p93 = por %p91, %p92
      %p94 = scmp.ne.s32.totalorder %s83, %s84
      %p95 = scmp.eq.s32.totalorder %s28, 0
      %p96 = por %p94, %p95
      %p97 = scmp.ne.s32.totalorder %s83, %s84
      %p98 = scmp.eq.s32.totalorder %s29, 1
      %p99 = por %p97, %p98
      %p101 = scmp.ne.s32.totalorder %s84, %s100
      %p102 = scmp.eq.s32.totalorder %s29, 0
      %p103 = por %p101, %p102
      %s104 = ssub.s32 %s23, %s30
      %p105 = scmp.eq.s32.totalorder %s104, 0
      %s107 = sadd.s32 %s106, 1
      %s108 = scalar_select %p105, %s106, %s107
      %p111 = pneg %p105
      %p112 = scmp.eq.s32.totalorder %s23, 1
      %p113 = por %p111, %p112
      %p114 = scmp.ne.s32.totalorder %s106, %s109
      %p115 = scmp.eq.s32.totalorder %s23, 0
      %p116 = por %p114, %p115
      %p117 = scmp.ne.s32.totalorder %s106, %s109
      %p118 = scmp.eq.s32.totalorder %s28, 1
      %p119 = por %p117, %p118
      %p120 = scmp.ne.s32.totalorder %s109, %s110
      %p121 = scmp.eq.s32.totalorder %s28, 0
      %p122 = por %p120, %p121
      %p123 = scmp.ne.s32.totalorder %s109, %s110
      %p124 = scmp.eq.s32.totalorder %s29, 1
      %p125 = por %p123, %p124
      %p127 = scmp.ne.s32.totalorder %s110, %s126
      %p128 = scmp.eq.s32.totalorder %s29, 0
      %p129 = por %p127, %p128
      %s130 = ssub.s32 %s23, %s30
      %p131 = scmp.eq.s32.totalorder %s130, 0
      %s133 = sadd.s32 %s132, 1
      %s134 = scalar_select %p131, %s132, %s133
      %p137 = pneg %p131
      %p138 = scmp.eq.s32.totalorder %s23, 1
      %p139 = por %p137, %p138
      %p140 = scmp.ne.s32.totalorder %s132, %s135
      %p141 = scmp.eq.s32.totalorder %s23, 0
      %p142 = por %p140, %p141
      %p143 = scmp.ne.s32.totalorder %s132, %s135
      %p144 = scmp.eq.s32.totalorder %s28, 1
      %p145 = por %p143, %p144
      %p146 = scmp.ne.s32.totalorder %s135, %s136
      %p147 = scmp.eq.s32.totalorder %s28, 0
      %p148 = por %p146, %p147
      %p149 = scmp.ne.s32.totalorder %s135, %s136
      %p150 = scmp.eq.s32.totalorder %s29, 1
      %p151 = por %p149, %p150
      %p153 = scmp.ne.s32.totalorder %s136, %s152
      %p154 = scmp.eq.s32.totalorder %s29, 0
      %p155 = por %p153, %p154
      %s156 = ssub.s32 %s23, %s30
      %p157 = scmp.eq.s32.totalorder %s156, 0
      %s159 = sadd.s32 %s158, 1
      %s160 = scalar_select %p157, %s158, %s159
      %p163 = pneg %p157
      %p164 = scmp.eq.s32.totalorder %s23, 1
      %p165 = por %p163, %p164
      %p166 = scmp.ne.s32.totalorder %s158, %s161
      %p167 = scmp.eq.s32.totalorder %s23, 0
      %p168 = por %p166, %p167
      %p169 = scmp.ne.s32.totalorder %s158, %s161
      %p170 = scmp.eq.s32.totalorder %s28, 1
      %p171 = por %p169, %p170
      %p172 = scmp.ne.s32.totalorder %s161, %s162
      %p173 = scmp.eq.s32.totalorder %s28, 0
      %p174 = por %p172, %p173
      %p175 = scmp.ne.s32.totalorder %s161, %s162
      %p176 = scmp.eq.s32.totalorder %s29, 1
      %p177 = por %p175, %p176
      %p179 = scmp.ne.s32.totalorder %s162, %s178
      %p180 = scmp.eq.s32.totalorder %s29, 0
      %p181 = por %p179, %p180
      %s182 = ssub.s32 %s23, %s30
      %p183 = scmp.eq.s32.totalorder %s182, 0
      %s185 = sadd.s32 %s184, 1
      %s186 = scalar_select %p183, %s184, %s185
      %p189 = pneg %p183
      %p190 = scmp.eq.s32.totalorder %s23, 1
      %p191 = por %p189, %p190
      %p192 = scmp.ne.s32.totalorder %s184, %s187
      %p193 = scmp.eq.s32.totalorder %s23, 0
      %p194 = por %p192, %p193
      %p195 = scmp.ne.s32.totalorder %s184, %s187
      %p196 = scmp.eq.s32.totalorder %s28, 1
      %p197 = por %p195, %p196
      %p198 = scmp.ne.s32.totalorder %s187, %s188
      %p199 = scmp.eq.s32.totalorder %s28, 0
      %p200 = por %p198, %p199
      %p201 = scmp.ne.s32.totalorder %s187, %s188
      %p202 = scmp.eq.s32.totalorder %s29, 1
      %p203 = por %p201, %p202
      %p205 = scmp.ne.s32.totalorder %s188, %s204
      %p206 = scmp.eq.s32.totalorder %s29, 0
      %p207 = por %p205, %p206
      %p208 = scmp.le.s32.totalorder 1, %s23
      %p209 = scmp.lt.s32.totalorder %s23, 3
      %p210 = pnand %p208, %p209
      %p211 = pneg %p210
      // Predicated region
      $region9: #{tpu_custom_call.1} parent=5 // pred_check
        _
      $region10: #{tpu_custom_call.1} parent=5 // pred_check_branch
        %213 = sbr.rel (%p210) target = $region12
      $region11: #{tpu_custom_call.1} parent=5 // pred_region
        %s214 = ssub.s32 %s23, 1
        // Predicated region
        $region13: #{tpu_custom_call.1} parent=11 // pred_check
          %p215 = pneg %p70
        $region14: #{tpu_custom_call.1} parent=11 // pred_check_branch
          %217 = sbr.rel (%p215) target = $region16
        $region15: #{tpu_custom_call.1} parent=11 // pred_region
          %s219 = ssub.s32 256, 256
          %220 = vsyncadd [#allocation6], %s219
          %s221 = sshll.u32 [#allocation5], 4
          %s222 = int_to_ptr.vmem [resolvable:$true] %s221
          %227 = dma.hbm_to_vmem [thread:$0]  %s1, 256, %s222, [#allocation6], 128, 128, 8
        $region16: #{tpu_custom_call.1} parent=11 // pred_fallthru
          _
      $region12: #{tpu_custom_call.1} parent=5 // pred_fallthru
        _
      %p228 = scmp.lt.s32.totalorder %s23, 2
      // Predicated region
      $region17: #{tpu_custom_call.1} parent=5 // pred_check
        %p229 = pneg %p228
      $region18: #{tpu_custom_call.1} parent=5 // pred_check_branch
        %231 = sbr.rel (%p229) target = $region20
      $region19: #{tpu_custom_call.1} parent=5 // pred_region
        // Predicated region
        $region21: #{tpu_custom_call.1} parent=19 // pred_check
          %p232 = pneg %p43
        $region22: #{tpu_custom_call.1} parent=19 // pred_check_branch
          %234 = sbr.rel (%p232) target = $region24
        $region23: #{tpu_custom_call.1} parent=19 // pred_region
          %s235 = sand.u32 %s23, 1
          %s236 = scalar_lea.sflag [#allocation3], %s235
          %s237 = sand.u32 %s33, 1
          %s238 = smul.addr %s237, 2
          %s239 = scalar_lea.vmem [#allocation2], %s238
          %s241 = ssub.s32 32, 32
          %242 = vsyncadd %s236, %s241
          %s243 = smul.addr %s23, 32
          %s244 = scalar_lea.hbm %s0, %s243
          %s246 = sshll.u32 %s239, 4
          %s247 = int_to_ptr.vmem [resolvable:$true] %s246
          %249 = dma.hbm_to_vmem [thread:$0]  %s244, 32, %s247, %s236
        $region24: #{tpu_custom_call.1} parent=19 // pred_fallthru
          _
        // Predicated region
        $region25: #{tpu_custom_call.1} parent=19 // pred_check
          %p250 = pneg %p90
        $region26: #{tpu_custom_call.1} parent=19 // pred_check_branch
          %252 = sbr.rel (%p250) target = $region28
        $region27: #{tpu_custom_call.1} parent=19 // pred_region
          %s253 = sand.u32 %s23, 1
          %s254 = scalar_lea.sflag [#allocation3], %s253
          %s255 = sand.u32 %s80, 1
          %s256 = smul.addr %s255, 8
          %s257 = scalar_lea.vmem [#allocation7], %s256
          %s259 = ssub.s32 128, 128
          %260 = vsyncadd %s254, %s259
          %s261 = smul.addr %s23, 2
          %s262 = smul.addr %s261, 64
          %s263 = scalar_lea.hbm %s2, %s262
          %s264 = sshll.u32 %s257, 4
          %s265 = int_to_ptr.vmem [resolvable:$true] %s264
          %270 = dma.hbm_to_vmem [thread:$0]  %s263, 128, %s265, %s254, 64, 64, 4
        $region28: #{tpu_custom_call.1} parent=19 // pred_fallthru
          _
        // Predicated region
        $region29: #{tpu_custom_call.1} parent=19 // pred_check
          %p271 = pneg %p116
        $region30: #{tpu_custom_call.1} parent=19 // pred_check_branch
          %273 = sbr.rel (%p271) target = $region32
        $region31: #{tpu_custom_call.1} parent=19 // pred_region
          %s274 = sand.u32 %s23, 1
          %s275 = scalar_lea.sflag [#allocation3], %s274
          %s276 = sand.u32 %s106, 1
          %s277 = smul.addr %s276, 8
          %s278 = scalar_lea.vmem [#allocation8], %s277
          %s280 = ssub.s32 128, 128
          %281 = vsyncadd %s275, %s280
          %s282 = smul.addr %s23, 2
          %s283 = smul.addr %s282, 64
          %s284 = scalar_lea.hbm %s3, %s283
          %s285 = sshll.u32 %s278, 4
          %s286 = int_to_ptr.vmem [resolvable:$true] %s285
          %291 = dma.hbm_to_vmem [thread:$0]  %s284, 128, %s286, %s275, 64, 64, 4
        $region32: #{tpu_custom_call.1} parent=19 // pred_fallthru
          _
        // Predicated region
        $region33: #{tpu_custom_call.1} parent=19 // pred_check
          %p292 = pneg %p142
        $region34: #{tpu_custom_call.1} parent=19 // pred_check_branch
          %294 = sbr.rel (%p292) target = $region36
        $region35: #{tpu_custom_call.1} parent=19 // pred_region
          %s295 = sand.u32 %s23, 1
          %s296 = scalar_lea.sflag [#allocation3], %s295
          %s297 = sand.u32 %s132, 1
          %s298 = smul.addr %s297, 8
          %s299 = scalar_lea.vmem [#allocation9], %s298
          %s301 = ssub.s32 128, 128
          %302 = vsyncadd %s296, %s301
          %s303 = smul.addr %s23, 2
          %s304 = smul.addr %s303, 64
          %s305 = scalar_lea.hbm %s4, %s304
          %s306 = sshll.u32 %s299, 4
          %s307 = int_to_ptr.vmem [resolvable:$true] %s306
          %312 = dma.hbm_to_vmem [thread:$0]  %s305, 128, %s307, %s296, 64, 64, 4
        $region36: #{tpu_custom_call.1} parent=19 // pred_fallthru
          _
      $region20: #{tpu_custom_call.1} parent=5 // pred_fallthru
        _
      %p313 = scmp.le.s32.totalorder 1, %s23
      %p314 = scmp.lt.s32.totalorder %s23, 3
      %p315 = pnand %p313, %p314
      %p316 = pneg %p315
      // Predicated region
      $region37: #{tpu_custom_call.1} parent=5 // pred_check
        _
      $region38: #{tpu_custom_call.1} parent=5 // pred_check_branch
        %318 = sbr.rel (%p315) target = $region40
      $region39: #{tpu_custom_call.1} parent=5 // pred_region
        %s319 = ssub.s32 %s23, 1
        %s320 = sand.u32 %s28, 1
        %s321 = scalar_lea.sflag [#allocation3], %s320
        %s322 = sand.u32 %s36, 1
        %s323 = smul.addr %s322, 2
        %s324 = scalar_lea.vmem [#allocation2], %s323
        // Predicated region
        $region41: #{tpu_custom_call.1} parent=39 // pred_check
          %p325 = pneg %p49
        $region42: #{tpu_custom_call.1} parent=39 // pred_check_branch
          %327 = sbr.rel (%p325) target = $region44
        $region43: #{tpu_custom_call.1} parent=39 // pred_region
          %328 = dma.done %s321, 32
        $region44: #{tpu_custom_call.1} parent=39 // pred_fallthru
          _
        // Predicated region
        $region45: #{tpu_custom_call.1} parent=39 // pred_check
          %p329 = pneg %p70
        $region46: #{tpu_custom_call.1} parent=39 // pred_check_branch
          %331 = sbr.rel (%p329) target = $region48
        $region47: #{tpu_custom_call.1} parent=39 // pred_region
          %332 = dma.done [#allocation6], 256
        $region48: #{tpu_custom_call.1} parent=39 // pred_fallthru
          _
        %s333 = sand.u32 %s28, 1
        %s334 = scalar_lea.sflag [#allocation3], %s333
        %s335 = sand.u32 %s83, 1
        %s336 = smul.addr %s335, 8
        %s337 = scalar_lea.vmem [#allocation7], %s336
        // Predicated region
        $region49: #{tpu_custom_call.1} parent=39 // pred_check
          %p338 = pneg %p96
        $region50: #{tpu_custom_call.1} parent=39 // pred_check_branch
          %340 = sbr.rel (%p338) target = $region52
        $region51: #{tpu_custom_call.1} parent=39 // pred_region
          %341 = dma.done %s334, 128
        $region52: #{tpu_custom_call.1} parent=39 // pred_fallthru
          _
        %s342 = sand.u32 %s28, 1
        %s343 = scalar_lea.sflag [#allocation3], %s342
        %s344 = sand.u32 %s109, 1
        %s345 = smul.addr %s344, 8
        %s346 = scalar_lea.vmem [#allocation8], %s345
        // Predicated region
        $region53: #{tpu_custom_call.1} parent=39 // pred_check
          %p347 = pneg %p122
        $region54: #{tpu_custom_call.1} parent=39 // pred_check_branch
          %349 = sbr.rel (%p347) target = $region56
        $region55: #{tpu_custom_call.1} parent=39 // pred_region
          %350 = dma.done %s343, 128
        $region56: #{tpu_custom_call.1} parent=39 // pred_fallthru
          _
        %s351 = sand.u32 %s28, 1
        %s352 = scalar_lea.sflag [#allocation3], %s351
        %s353 = sand.u32 %s135, 1
        %s354 = smul.addr %s353, 8
        %s355 = scalar_lea.vmem [#allocation9], %s354
        // Predicated region
        $region57: #{tpu_custom_call.1} parent=39 // pred_check
          %p356 = pneg %p148
        $region58: #{tpu_custom_call.1} parent=39 // pred_check_branch
          %358 = sbr.rel (%p356) target = $region60
        $region59: #{tpu_custom_call.1} parent=39 // pred_region
          %359 = dma.done %s352, 128
        $region60: #{tpu_custom_call.1} parent=39 // pred_fallthru
          _
        %s360 = sand.u32 %s28, 1
        %s361 = scalar_lea.sflag [#allocation3], %s360
        %s362 = sand.u32 %s36, 1
        %s363 = smul.addr %s362, 2
        %s364 = scalar_lea.vmem [#allocation2], %s363
        %p365 = pneg %p49
        %p366 = pneg %p46
        %p367 = pneg %p70
        %p368 = pneg %p67
        %s369 = sand.u32 %s28, 1
        %s370 = scalar_lea.sflag [#allocation3], %s369
        %s371 = sand.u32 %s83, 1
        %s372 = smul.addr %s371, 8
        %s373 = scalar_lea.vmem [#allocation7], %s372
        %p374 = pneg %p96
        %p375 = pneg %p93
        %s376 = sand.u32 %s28, 1
        %s377 = scalar_lea.sflag [#allocation3], %s376
        %s378 = sand.u32 %s109, 1
        %s379 = smul.addr %s378, 8
        %s380 = scalar_lea.vmem [#allocation8], %s379
        %p381 = pneg %p122
        %p382 = pneg %p119
        %s383 = sand.u32 %s28, 1
        %s384 = scalar_lea.sflag [#allocation3], %s383
        %s385 = sand.u32 %s135, 1
        %s386 = smul.addr %s385, 8
        %s387 = scalar_lea.vmem [#allocation9], %s386
        %p388 = pneg %p148
        %p389 = pneg %p145
        %p390 = pneg %p174
        %p391 = pneg %p171
        %s392 = sand.u32 %s161, 1
        %s393 = scalar_lea.sflag [#allocation4], %s392
        %s394 = sand.u32 %s161, 1
        %s395 = smul.addr %s394, 16
        %s396 = scalar_lea.vmem [#allocation10], %s395
        %p397 = pneg %p200
        %p398 = pneg %p197
        %s399 = sand.u32 %s187, 1
        %s400 = scalar_lea.sflag [#allocation12], %s399
        %s401 = sand.u32 %s187, 1
        %s402 = smul.addr %s401, 16
        %s403 = scalar_lea.vmem [#allocation11], %s402
        %v407 = vld [vmem:[%s337] sm:$0xf]
        %v408 = vld [vmem:[%s337 + $0x4] sm:$0xf]
        %v409 = vld [vmem:[%s346] sm:$0xf]
        %v410 = vld [vmem:[%s346 + $0x4] sm:$0xf]
        %v411 = vld [vmem:[%s355] sm:$0xf]
        %v412 = vld [vmem:[%s355 + $0x4] sm:$0xf]
        %v413 = vld [vmem:[#allocation5] sm:$0xff]
        %v414 = vld [vmem:[#allocation5 + $0x8] sm:$0xff]
        %v415 = vld [vmem:[%s324] sm:$0x3]
        %vm416 = vcmask 130048
        %v418 = vsel %vm416, %v407, 0
        %v421 = vsel %vm416, %v409, 0
        %423 = vmatprep.subr.bf16.mxu0 0
        %424 = vmatpush1.bf16.xpose.msra.mxu0 %v421
        %425 = vmatprep.subr.bf16.mxu0 0
        %426 = vmatpush1.bf16.xpose.msra.mxu0 0
        %427 = vmatprep.subr.bf16.mxu0 0
        %428 = vmatpush1.bf16.xpose.msra.mxu0 0
        %429 = vmatprep.subr.bf16.mxu0 0
        %430 = vmatpush1.bf16.xpose.msra.mxu0 0
        %431 = vmatprep.subr.bf16.mxu0 0
        %432 = vmatpush1.bf16.xpose.msra.mxu0 0
        %433 = vmatprep.subr.bf16.mxu0 0
        %434 = vmatpush1.bf16.xpose.msra.mxu0 0
        %435 = vmatprep.subr.bf16.mxu0 0
        %436 = vmatpush1.bf16.xpose.msra.mxu0 0
        %437 = vmatprep.subr.bf16.mxu0 0
        %438 = vmatpush1.bf16.xpose.msra.mxu0 0
        %439 = vmatprep.subr.bf16.mxu0 0
        %440 = vmatpush1.bf16.xpose.msra.mxu0 0
        %441 = vmatprep.subr.bf16.mxu0 0
        %442 = vmatpush1.bf16.xpose.msra.mxu0 0
        %443 = vmatprep.subr.bf16.mxu0 0
        %444 = vmatpush1.bf16.xpose.msra.mxu0 0
        %445 = vmatprep.subr.bf16.mxu0 0
        %446 = vmatpush1.bf16.xpose.msra.mxu0 0
        %447 = vmatprep.subr.bf16.mxu0 0
        %448 = vmatpush1.bf16.xpose.msra.mxu0 0
        %449 = vmatprep.subr.bf16.mxu0 0
        %450 = vmatpush1.bf16.xpose.msra.mxu0 0
        %451 = vmatprep.subr.bf16.mxu0 0
        %452 = vmatpush1.bf16.xpose.msra.mxu0 0
        %453 = vmatprep.subr.bf16.mxu0 0
        %454 = vmatpush1.bf16.xpose.msra.mxu0 0
        %455 = vmatprep.mubr.bf16.mxu0 0
        %456 = vmatmul.mubr.bf16.gmra.mrb[0].mxu0 %v418
        %v457 = vpop.f32.mrb[0].mxu0
        %v458 = vadd.f32 0.0, %v457
        %v459 = vpop.f32.mrb[0].mxu0
        %v460 = vpop.f32.mrb[0].mxu0
        %v461 = vpop.f32.mrb[0].mxu0
        %462 = vdwg.mxu0
        %v464 = vsel %vm416, %v408, 0
        %v467 = vsel %vm416, %v410, 0
        %469 = vmatprep.subr.bf16.mxu0 0
        %470 = vmatpush1.bf16.xpose.msra.mxu0 %v467
        %471 = vmatprep.subr.bf16.mxu0 0
        %472 = vmatpush1.bf16.xpose.msra.mxu0 0
        %473 = vmatprep.subr.bf16.mxu0 0
        %474 = vmatpush1.bf16.xpose.msra.mxu0 0
        %475 = vmatprep.subr.bf16.mxu0 0
        %476 = vmatpush1.bf16.xpose.msra.mxu0 0
        %477 = vmatprep.subr.bf16.mxu0 0
        %478 = vmatpush1.bf16.xpose.msra.mxu0 0
        %479 = vmatprep.subr.bf16.mxu0 0
        %480 = vmatpush1.bf16.xpose.msra.mxu0 0
        %481 = vmatprep.subr.bf16.mxu0 0
        %482 = vmatpush1.bf16.xpose.msra.mxu0 0
        %483 = vmatprep.subr.bf16.mxu0 0
        %484 = vmatpush1.bf16.xpose.msra.mxu0 0
        %485 = vmatprep.subr.bf16.mxu0 0
        %486 = vmatpush1.bf16.xpose.msra.mxu0 0
        %487 = vmatprep.subr.bf16.mxu0 0
        %488 = vmatpush1.bf16.xpose.msra.mxu0 0
        %489 = vmatprep.subr.bf16.mxu0 0
        %490 = vmatpush1.bf16.xpose.msra.mxu0 0
        %491 = vmatprep.subr.bf16.mxu0 0
        %492 = vmatpush1.bf16.xpose.msra.mxu0 0
        %493 = vmatprep.subr.bf16.mxu0 0
        %494 = vmatpush1.bf16.xpose.msra.mxu0 0
        %495 = vmatprep.subr.bf16.mxu0 0
        %496 = vmatpush1.bf16.xpose.msra.mxu0 0
        %497 = vmatprep.subr.bf16.mxu0 0
        %498 = vmatpush1.bf16.xpose.msra.mxu0 0
        %499 = vmatprep.subr.bf16.mxu0 0
        %500 = vmatpush1.bf16.xpose.msra.mxu0 0
        %501 = vmatprep.mubr.bf16.mxu0 0
        %502 = vmatmul.mubr.bf16.gmra.mrb[0].mxu0 %v464
        %v503 = vpop.f32.mrb[0].mxu0
        %v504 = vadd.f32 0.0, %v503
        %v505 = vpop.f32.mrb[0].mxu0
        %v506 = vpop.f32.mrb[0].mxu0
        %v507 = vpop.f32.mrb[0].mxu0
        %508 = vdwg.mxu0
        %v509 = vmul.f32 %v458, %v413
        %v510 = vmul.f32 %v504, %v414
        %vm511 = vnez %v415
        %v512 = vsel %vm511, 16843009, 0
        %v513 = vunpack.c.0.s8 %v512
        %vm514 = vcmp.ne.s32.totalorder %v513, 0
        %v515 = vsel %vm514, 1, 0
        %vm516 = vcmp.eq.s32.totalorder %v515, 1
        %v517 = vsel %vm516, %v509, -1e+09
        %v518 = vsel %vm516, %v510, -1e+09
        %vm519 = vcmask 64512
        %v520 = vsel %vm519, %v517, -inf
        %521 = vmax.xlane.f32.xlu0 %v520
        %v522 = vpop.xlane.xlu0 %521
        %v523 = vsel %vm519, %v518, -inf
        %524 = vmax.xlane.f32.xlu0 %v523
        %v525 = vpop.xlane.xlu0 %524
        %v526 = vsub.f32 %v517, %v522
        %v527 = vsub.f32 %v518, %v525
        %v528 = vmul.f32 %v526, 1.442695
        %v529 = vpow.pop %v528
        %v530 = vmul.f32 %v527, 1.442695
        %v531 = vpow.pop %v530
        %v532 = vsel %vm519, %v529, 0.0
        %533 = vadd.xlane.f32.xlu0 %v532
        %v534 = vpop.xlane.xlu0 %533
        %v535 = vsel %vm519, %v531, 0.0
        %536 = vadd.xlane.f32.xlu0 %v535
        %v537 = vpop.xlane.xlu0 %536
        %v538 = vrcp.pop %v534
        %v539 = vrcp.pop %v537
        %v540 = vmul.f32 %v529, %v538
        %v541 = vmul.f32 %v531, %v539
        %542 = vst.msk [vmem:[%s403] sm:$0xff] %vm519, %v540
        %543 = vst.msk [vmem:[%s403 + $0x8] sm:$0xff] %vm519, %v541
        %v544 = vpack.c.bf16 %v540, %v540
        %v545 = vpack.c.bf16 %v541, %v541
        %v547 = vsel %vm519, %v544, 0
        %vm549 = vcmask 1043456
        %v551 = vsel %vm549, %v411, 0
        %553 = vmatprep.subr.bf16.mxu0 0
        %554 = vmatpush1.bf16.msra.mxu0 %v551
        %555 = vmatprep.subr.bf16.mxu0 0
        %556 = vmatpush1.bf16.msra.mxu0 0
        %557 = vmatprep.subr.bf16.mxu0 0
        %558 = vmatpush1.bf16.msra.mxu0 0
        %559 = vmatprep.subr.bf16.mxu0 0
        %560 = vmatpush1.bf16.msra.mxu0 0
        %561 = vmatprep.subr.bf16.mxu0 0
        %562 = vmatpush1.bf16.msra.mxu0 0
        %563 = vmatprep.subr.bf16.mxu0 0
        %564 = vmatpush1.bf16.msra.mxu0 0
        %565 = vmatprep.subr.bf16.mxu0 0
        %566 = vmatpush1.bf16.msra.mxu0 0
        %567 = vmatprep.subr.bf16.mxu0 0
        %568 = vmatpush1.bf16.msra.mxu0 0
        %569 = vmatprep.subr.bf16.mxu0 0
        %570 = vmatpush1.bf16.msra.mxu0 0
        %571 = vmatprep.subr.bf16.mxu0 0
        %572 = vmatpush1.bf16.msra.mxu0 0
        %573 = vmatprep.subr.bf16.mxu0 0
        %574 = vmatpush1.bf16.msra.mxu0 0
        %575 = vmatprep.subr.bf16.mxu0 0
        %576 = vmatpush1.bf16.msra.mxu0 0
        %577 = vmatprep.subr.bf16.mxu0 0
        %578 = vmatpush1.bf16.msra.mxu0 0
        %579 = vmatprep.subr.bf16.mxu0 0
        %580 = vmatpush1.bf16.msra.mxu0 0
        %581 = vmatprep.subr.bf16.mxu0 0
        %582 = vmatpush1.bf16.msra.mxu0 0
        %583 = vmatprep.subr.bf16.mxu0 0
        %584 = vmatpush1.bf16.msra.mxu0 0
        %585 = vmatprep.mubr.bf16.mxu0 0
        %586 = vmatmul.mubr.bf16.gmra.mrb[0].mxu0 %v547
        %v587 = vpop.f32.mrb[0].mxu0
        %v588 = vadd.f32 0.0, %v587
        %v589 = vpop.f32.mrb[0].mxu0
        %v590 = vpop.f32.mrb[0].mxu0
        %v591 = vpop.f32.mrb[0].mxu0
        %592 = vdwg.mxu0
        %v594 = vsel %vm519, %v545, 0
        %v597 = vsel %vm549, %v412, 0
        %599 = vmatprep.subr.bf16.mxu0 0
        %600 = vmatpush1.bf16.msra.mxu0 %v597
        %601 = vmatprep.subr.bf16.mxu0 0
        %602 = vmatpush1.bf16.msra.mxu0 0
        %603 = vmatprep.subr.bf16.mxu0 0
        %604 = vmatpush1.bf16.msra.mxu0 0
        %605 = vmatprep.subr.bf16.mxu0 0
        %606 = vmatpush1.bf16.msra.mxu0 0
        %607 = vmatprep.subr.bf16.mxu0 0
        %608 = vmatpush1.bf16.msra.mxu0 0
        %609 = vmatprep.subr.bf16.mxu0 0
        %610 = vmatpush1.bf16.msra.mxu0 0
        %611 = vmatprep.subr.bf16.mxu0 0
        %612 = vmatpush1.bf16.msra.mxu0 0
        %613 = vmatprep.subr.bf16.mxu0 0
        %614 = vmatpush1.bf16.msra.mxu0 0
        %615 = vmatprep.subr.bf16.mxu0 0
        %616 = vmatpush1.bf16.msra.mxu0 0
        %617 = vmatprep.subr.bf16.mxu0 0
        %618 = vmatpush1.bf16.msra.mxu0 0
        %619 = vmatprep.subr.bf16.mxu0 0
        %620 = vmatpush1.bf16.msra.mxu0 0
        %621 = vmatprep.subr.bf16.mxu0 0
        %622 = vmatpush1.bf16.msra.mxu0 0
        %623 = vmatprep.subr.bf16.mxu0 0
        %624 = vmatpush1.bf16.msra.mxu0 0
        %625 = vmatprep.subr.bf16.mxu0 0
        %626 = vmatpush1.bf16.msra.mxu0 0
        %627 = vmatprep.subr.bf16.mxu0 0
        %628 = vmatpush1.bf16.msra.mxu0 0
        %629 = vmatprep.subr.bf16.mxu0 0
        %630 = vmatpush1.bf16.msra.mxu0 0
        %631 = vmatprep.mubr.bf16.mxu0 0
        %632 = vmatmul.mubr.bf16.gmra.mrb[0].mxu0 %v594
        %v633 = vpop.f32.mrb[0].mxu0
        %v634 = vadd.f32 0.0, %v633
        %v635 = vpop.f32.mrb[0].mxu0
        %v636 = vpop.f32.mrb[0].mxu0
        %v637 = vpop.f32.mrb[0].mxu0
        %638 = vdwg.mxu0
        %639 = vst.msk [vmem:[%s396] sm:$0xff] %vm416, %v588
        %640 = vst.msk [vmem:[%s396 + $0x8] sm:$0xff] %vm416, %v634
        %s641 = sand.u32 %s161, 1
        %s642 = scalar_lea.sflag [#allocation4], %s641
        %s643 = sand.u32 %s161, 1
        %s644 = smul.addr %s643, 16
        %s645 = scalar_lea.vmem [#allocation10], %s644
        %s646 = sand.u32 %s187, 1
        %s647 = scalar_lea.sflag [#allocation12], %s646
        %s648 = sand.u32 %s187, 1
        %s649 = smul.addr %s648, 16
        %s650 = scalar_lea.vmem [#allocation11], %s649
        // Predicated region
        $region61: #{tpu_custom_call.1} parent=39 // pred_check
          %p651 = pneg %p171
        $region62: #{tpu_custom_call.1} parent=39 // pred_check_branch
          %653 = sbr.rel (%p651) target = $region64
        $region63: #{tpu_custom_call.1} parent=39 // pred_region
          %s655 = ssub.s32 256, 256
          %656 = vsyncadd %s642, %s655
          %s657 = smul.addr %s28, 2
          %s658 = smul.addr %s657, 128
          %s659 = scalar_lea.hbm %s5, %s658
          %s660 = sshll.u32 %s645, 4
          %s661 = int_to_ptr.vmem [resolvable:$true] %s660
          %666 = dma.vmem_to_hbm [thread:$0]  %s661, 256, %s659, %s642, 128, 128, 8
        $region64: #{tpu_custom_call.1} parent=39 // pred_fallthru
          _
        // Predicated region
        $region65: #{tpu_custom_call.1} parent=39 // pred_check
          %p667 = pneg %p197
        $region66: #{tpu_custom_call.1} parent=39 // pred_check_branch
          %669 = sbr.rel (%p667) target = $region68
        $region67: #{tpu_custom_call.1} parent=39 // pred_region
          %s671 = ssub.s32 256, 256
          %672 = vsyncadd %s647, %s671
          %s673 = smul.addr %s28, 2
          %s674 = smul.addr %s673, 128
          %s675 = scalar_lea.hbm %s6, %s674
          %s676 = sshll.u32 %s650, 4
          %s677 = int_to_ptr.vmem [resolvable:$true] %s676
          %682 = dma.vmem_to_hbm [thread:$0]  %s677, 256, %s675, %s647, 128, 128, 8
        $region68: #{tpu_custom_call.1} parent=39 // pred_fallthru
          _
      $region40: #{tpu_custom_call.1} parent=5 // pred_fallthru
        _
      %p683 = scmp.le.s32.totalorder 2, %s23
      // Predicated region
      $region69: #{tpu_custom_call.1} parent=5 // pred_check
        %p684 = pneg %p683
      $region70: #{tpu_custom_call.1} parent=5 // pred_check_branch
        %686 = sbr.rel (%p684) target = $region72
      $region71: #{tpu_custom_call.1} parent=5 // pred_region
        %s687 = ssub.s32 %s23, 2
        // Predicated region
        $region73: #{tpu_custom_call.1} parent=71 // pred_check
          %p688 = pneg %p177
        $region74: #{tpu_custom_call.1} parent=71 // pred_check_branch
          %690 = sbr.rel (%p688) target = $region76
        $region75: #{tpu_custom_call.1} parent=71 // pred_region
          %s691 = sand.u32 %s162, 1
          %s692 = scalar_lea.sflag [#allocation4], %s691
          %s693 = sand.u32 %s162, 1
          %s694 = smul.addr %s693, 16
          %s695 = scalar_lea.vmem [#allocation10], %s694
          %696 = dma.done %s692, 256
        $region76: #{tpu_custom_call.1} parent=71 // pred_fallthru
          _
        // Predicated region
        $region77: #{tpu_custom_call.1} parent=71 // pred_check
          %p697 = pneg %p203
        $region78: #{tpu_custom_call.1} parent=71 // pred_check_branch
          %699 = sbr.rel (%p697) target = $region80
        $region79: #{tpu_custom_call.1} parent=71 // pred_region
          %s700 = sand.u32 %s188, 1
          %s701 = scalar_lea.sflag [#allocation12], %s700
          %s702 = sand.u32 %s188, 1
          %s703 = smul.addr %s702, 16
          %s704 = scalar_lea.vmem [#allocation11], %s703
          %705 = dma.done %s701, 256
        $region80: #{tpu_custom_call.1} parent=71 // pred_fallthru
          _
      $region72: #{tpu_custom_call.1} parent=5 // pred_fallthru
        _
    $region6: #{tpu_custom_call.1} parent=1 // loop_footer
      %s27 = sadd.s32 1, %s23
    $region7: #{tpu_custom_call.1} parent=1 // loop_footer_branch
      %22 = sbr.rel target = $region3
    $region8: #{tpu_custom_call.1} parent=1 // loop_exit
      _
    %706 = vsyncpa [#allocation3], 1
    %s707 = scalar_lea.sflag [#allocation3], 1
    %708 = vsyncpa %s707, 1
    %709 = vsyncpa [#allocation6], 1
    %710 = vsyncpa [#allocation4], 1
    %s711 = scalar_lea.sflag [#allocation4], 1
    %712 = vsyncpa %s711, 1
    %713 = vsyncpa [#allocation12], 1
    %s714 = scalar_lea.sflag [#allocation12], 1
    %715 = vsyncpa %s714, 1

</llo_original>
